<compile_context>
chip_gen: v7x
topology: tpu7x:2x2x1
jax: 0.10.0
libtpu: 0.0.40
codegen_flags: <defaults>
</compile_context>

<pallas_src>
import functools

import jax
import jax.numpy as jnp
from jax.experimental import pallas as pl
from jax.experimental.pallas import tpu as pltpu

_LANE = 128
_SUBLANE_BF16 = 16  # bf16 tiles want row counts in multiples of 16


def _round_up(n, m):
    return ((n + m - 1) // m) * m


def _pad2(a, rows, cols, dtype=None):
    """Zero-pad a 2-D array to (rows, cols), optionally casting."""
    out = jnp.pad(a, ((0, rows - a.shape[0]), (0, cols - a.shape[1])))
    return out.astype(dtype) if dtype is not None else out


def _tpu_vmem_capacity_bytes():
    try:
        return int(pltpu.get_tpu_info().vmem_capacity_bytes)
    except Exception:
        return 64 * 2**20  # conservative fallback (v7x per-TensorCore)


# -----------------------------------------------------------------------------
# One-time weight packing (hoisted out of the per-call forward).
# -----------------------------------------------------------------------------
def pack_dense_encoder_params(params):
    """Pad to lane multiples, cast matmul weights to bf16, fuse the mu/var heads.

    params: dict with
      'hidden': list of (W, b); W: (in, out) [transpose of torch Linear.weight],
                b: (1, out)
      'mu':     (W, b)
      'var':    (W, b)
    """
    hidden = params["hidden"]
    w_mu, b_mu = params["mu"]
    w_var, b_var = params["var"]

    in_dim = hidden[0][0].shape[0] if hidden else w_mu.shape[0]
    out_dim = w_mu.shape[1]
    dims = [in_dim] + [w.shape[1] for (w, _) in hidden]
    pdims = [_round_up(d, _LANE) for d in dims]
    out_pad = _round_up(out_dim, _LANE)

    weights, biases = [], []
    for li, (w, b) in enumerate(hidden):
        weights.append(_pad2(w, pdims[li], pdims[li + 1], jnp.bfloat16))
        biases.append(_pad2(b, 1, pdims[li + 1], jnp.float32))

    # Fused heads: [W_mu | W_var] along the output axis, lane-aligned halves.
    w_heads = jnp.concatenate(
        [_pad2(w_mu, pdims[-1], out_pad, jnp.bfloat16),
         _pad2(w_var, pdims[-1], out_pad, jnp.bfloat16)], axis=1)
    b_heads = jnp.concatenate(
        [_pad2(b_mu, 1, out_pad, jnp.float32),
         _pad2(b_var, 1, out_pad, jnp.float32)], axis=1)

    return {
        "weights": weights, "biases": biases,
        "w_heads": w_heads, "b_heads": b_heads,
        "pdims": pdims, "out_pad": out_pad,
        "in_dim": in_dim, "out_dim": out_dim,
        "n_hidden": len(hidden),
    }


# -----------------------------------------------------------------------------
# Kernel
# -----------------------------------------------------------------------------
def _dense_encoder_kernel(n_hidden, out_pad, *refs):
    """Fused MLP encoder kernel (one batch tile per grid step).

    refs layout:
      [x_tile,
       w1, b1, ..., w_{n_hidden}, b_{n_hidden},
       w_heads, b_heads,              # [W_mu | W_var] fused along out axis
       out_tile]                      # (tb, 2*out_pad): [mu | var]
    Weights are bf16 (MXU), biases/activations f32 (VPU/EUP).
    """
    x_ref = refs[0]
    out_ref = refs[-1]

    idx = 1
    h = x_ref[...]                                        # bf16 (tb, in_pad)

    # Hidden stack: bf16 matmul -> f32 accumulate -> f32 bias + ReLU.
    for _ in range(n_hidden):
        w_ref, b_ref = refs[idx], refs[idx + 1]
        idx += 2
        acc = jnp.dot(h, w_ref[...], preferred_element_type=jnp.float32)
        acc = acc + b_ref[...]
        h = jnp.maximum(acc, 0.0).astype(jnp.bfloat16)

    w_heads_ref, b_heads_ref = refs[idx], refs[idx + 1]

    heads = jnp.dot(h, w_heads_ref[...], preferred_element_type=jnp.float32)
    heads = heads + b_heads_ref[...]                      # (tb, 2*out_pad) f32

    # exp(clip(.)) over the full slab (EUP, cheap), then lane-select the mu
    # half vs. the var half -> single wide lane-dense store, no lane slices.
    var_all = jnp.exp(jnp.clip(heads, -15.0, 15.0))
    lane = jax.lax.broadcasted_iota(jnp.int32, heads.shape, 1)
    out_ref[...] = jnp.where(lane < out_pad, heads, var_all).astype(out_ref.dtype)


# -----------------------------------------------------------------------------
# Wrapper
# -----------------------------------------------------------------------------
def dense_encoder_forward(x, packed, *, tb=None, vmem_frac=0.85):
    """Run the fused encoder. `packed` comes from pack_dense_encoder_params.

    Returns (mu, var), matching DenseEncoder.forward.
    """
    pdims = packed["pdims"]
    out_pad = packed["out_pad"]
    in_dim = packed["in_dim"]
    out_dim = packed["out_dim"]
    n_hidden = packed["n_hidden"]

    batch = x.shape[0]
    assert x.shape[1] == in_dim

    weight_arrays = []
    for w, b in zip(packed["weights"], packed["biases"]):
        weight_arrays += [w, b]
    weight_arrays += [packed["w_heads"], packed["b_heads"]]
    weight_bytes = sum(int(a.size) * a.dtype.itemsize for a in weight_arrays)

    # ---- hardware-derived VMEM budget -----------------------------------------
    vmem_cap = _tpu_vmem_capacity_bytes()
    budget = int(vmem_frac * vmem_cap)

    maxw = max(pdims + [2 * out_pad])
    # Per-batch-row VMEM: double-buffered x tile (bf16), double-buffered fused
    # output tile (f32), plus a few f32 intermediates kept live by the compiler.
    per_row = 2 * pdims[0] * 2 + 2 * (2 * out_pad) * 4 + 4 * maxw * 4

    # ---- batch tile: as large as the remaining budget allows (<= 512) ---------
    if tb is None:
        avail = max(budget - weight_bytes, per_row * _SUBLANE_BF16)
        tb = min(512, avail // per_row)
    tb = max(_SUBLANE_BF16, (int(tb) // _SUBLANE_BF16) * _SUBLANE_BF16)
    tb = min(tb, _round_up(batch, _SUBLANE_BF16))
    # Guarantee >= 2 grid steps when the batch allows it (v7x has 2 TCs/chip).
    if batch >= 2 * _SUBLANE_BF16:
        tb = min(tb, _round_up(-(-batch // 2), _SUBLANE_BF16))
    batch_pad = _round_up(batch, tb)
    grid = (batch_pad // tb,)

    # ---- pad + cast the activations --------------------------------------------
    xp = _pad2(x, batch_pad, pdims[0], jnp.bfloat16)

    # ---- specs ------------------------------------------------------------------
    def _const_spec(arr):
        # Constant index_map: fetched once; single-buffer it so only ONE VMEM
        # copy of each weight is resident.
        kw = {}
        if hasattr(pl, "Buffered"):
            kw["pipeline_mode"] = pl.Buffered(1)
        return pl.BlockSpec(arr.shape, lambda i: (0, 0), **kw)

    in_specs = [pl.BlockSpec((tb, pdims[0]), lambda i: (i, 0))]
    in_specs += [_const_spec(a) for a in weight_arrays]
    out_spec = pl.BlockSpec((tb, 2 * out_pad), lambda i: (i, 0))

    # ---- VMEM limit: estimate, floored at 32 MiB, capped at 0.9 * physical ------
    tile_bytes = 2 * tb * pdims[0] * 2 + 2 * tb * (2 * out_pad) * 4
    act_bytes = 4 * tb * maxw * 4
    est = weight_bytes + tile_bytes + act_bytes
    vmem_limit = int(min(max(est, 32 * 2**20), int(0.9 * vmem_cap)))

    kernel = functools.partial(_dense_encoder_kernel, n_hidden, out_pad)

    out = pl.pallas_call(
        kernel,
        grid=grid,
        in_specs=in_specs,
        out_specs=out_spec,
        out_shape=jax.ShapeDtypeStruct((batch_pad, 2 * out_pad), jnp.float32),
        compiler_params=pltpu.CompilerParams(
            dimension_semantics=("parallel",),
            vmem_limit_bytes=vmem_limit,
        ),
    )(xp, *weight_arrays)

    mu = out[:batch, :out_dim]
    var = out[:batch, out_pad:out_pad + out_dim]
    return mu, var


# -----------------------------------------------------------------------------
# Synthetic params, reference, checks
# -----------------------------------------------------------------------------
def init_dense_encoder_params(key, input_dim, hidden_dims, output_dim):
    """Deterministic synthetic init, PyTorch-Linear-style U(-1/sqrt(fan_in), +)."""
    def linear(k, fan_in, fan_out):
        kw, kb = jax.random.split(k)
        bound = 1.0 / jnp.sqrt(jnp.float32(fan_in))
        w = jax.random.uniform(kw, (fan_in, fan_out), jnp.float32, -bound, bound)
        b = jax.random.uniform(kb, (1, fan_out), jnp.float32, -bound, bound)
        return w, b

    dims = [input_dim] + list(hidden_dims)
    keys = jax.random.split(key, len(hidden_dims) + 2)
    hidden = [linear(keys[i], dims[i], dims[i + 1]) for i in range(len(hidden_dims))]
    mu = linear(keys[-2], hidden_dims[-1], output_dim)
    var = linear(keys[-1], hidden_dims[-1], output_dim)
    return {"hidden": hidden, "mu": mu, "var": var}


def _reference_forward(x, params):
    """Pure-JAX f32 reference (matches the PyTorch module)."""
    h = x
    for (w, b) in params["hidden"]:
        h = jnp.maximum(h @ w + b, 0.0)
    w_mu, b_mu = params["mu"]
    w_var, b_var = params["var"]
    mu = h @ w_mu + b_mu
    var = jnp.exp(jnp.clip(h @ w_var + b_var, -15.0, 15.0))
    return mu, var


def _check(batch, input_dim, hidden_dims, output_dim, seed, tb=None):
    key = jax.random.PRNGKey(seed)
    k_x, k_p = jax.random.split(key)
    x = jax.random.normal(k_x, (batch, input_dim), dtype=jnp.float32)
    params = init_dense_encoder_params(k_p, input_dim, hidden_dims, output_dim)

    packed = pack_dense_encoder_params(params)   # one-time weight repack
    mu, var = dense_encoder_forward(x, packed, tb=tb)
    jax.block_until_ready((mu, var))

    mu_ref, var_ref = _reference_forward(x, params)
    assert mu.shape == (batch, output_dim) and var.shape == (batch, output_dim)
    # bf16 matmuls with f32 accumulation: loose tolerance vs. the f32 reference.
    assert jnp.allclose(mu, mu_ref, atol=3e-2, rtol=3e-2)
    assert jnp.allclose(var, var_ref, atol=3e-2, rtol=3e-2)
    assert bool(jnp.all(var > 0.0))


if __name__ == "__main__":
    # Small shapes consistent with the module: x: [batch, input_dim].
    _check(batch=8, input_dim=32, hidden_dims=[64, 32], output_dim=16, seed=0)
    # Larger batch to exercise the multi-tile grid, megacore split (>=2 steps),
    # and ragged-batch padding path.
    _check(batch=300, input_dim=32, hidden_dims=[64, 32], output_dim=16, seed=0,
           tb=128)
    print("KERNEL_OK")
</pallas_src>

<mosaic_0001>
module attributes {stable_mosaic.version = 11 : i64} {
  func.func @_dense_encoder_kernel(%arg0: i32, %arg1: memref<16x128xbf16, #tpu.memory_space<vmem>>, %arg2: memref<128x128xbf16, #tpu.memory_space<vmem>>, %arg3: memref<1x128xf32, #tpu.memory_space<vmem>>, %arg4: memref<128x128xbf16, #tpu.memory_space<vmem>>, %arg5: memref<1x128xf32, #tpu.memory_space<vmem>>, %arg6: memref<128x256xbf16, #tpu.memory_space<vmem>>, %arg7: memref<1x256xf32, #tpu.memory_space<vmem>>, %arg8: memref<16x256xf32, #tpu.memory_space<vmem>>) attributes {dimension_semantics = [#tpu.dimension_semantics<parallel>], iteration_bounds = array<i64: 1>, scalar_prefetch = 0 : i64, scratch_operands = 0 : i64, tpu.core_type = #tpu.core_type<tc>, window_params = [{transform_indices = @transform_0, window_bounds = array<i64: 16, 128>}, {pipeline_mode = #tpu.pipeline_mode<synchronous>, transform_indices = @transform_1, window_bounds = array<i64: 128, 128>}, {pipeline_mode = #tpu.pipeline_mode<synchronous>, transform_indices = @transform_2, window_bounds = array<i64: 1, 128>}, {pipeline_mode = #tpu.pipeline_mode<synchronous>, transform_indices = @transform_3, window_bounds = array<i64: 128, 128>}, {pipeline_mode = #tpu.pipeline_mode<synchronous>, transform_indices = @transform_4, window_bounds = array<i64: 1, 128>}, {pipeline_mode = #tpu.pipeline_mode<synchronous>, transform_indices = @transform_5, window_bounds = array<i64: 128, 256>}, {pipeline_mode = #tpu.pipeline_mode<synchronous>, transform_indices = @transform_6, window_bounds = array<i64: 1, 256>}, {transform_indices = @transform_7, window_bounds = array<i64: 16, 256>}]} {
    %c0 = arith.constant 0 : index
    %c0_0 = arith.constant 0 : index
    %0 = vector.load %arg1[%c0, %c0_0] : memref<16x128xbf16, #tpu.memory_space<vmem>>, vector<16x128xbf16>
    %c0_1 = arith.constant 0 : index
    %c0_2 = arith.constant 0 : index
    %1 = vector.load %arg2[%c0_1, %c0_2] : memref<128x128xbf16, #tpu.memory_space<vmem>>, vector<128x128xbf16>
    %cst = arith.constant dense<0.000000e+00> : vector<16x128xf32>
    %2 = tpu.matmul %0, %1, %cst {dimension_numbers = #tpu.dot_dimension_numbers<[1], [0], [0], [1], [0, 0, 1, 1], [], []>} : vector<16x128xbf16>, vector<128x128xbf16>, vector<16x128xf32> -> vector<16x128xf32>
    %c0_3 = arith.constant 0 : index
    %c0_4 = arith.constant 0 : index
    %3 = vector.load %arg3[%c0_3, %c0_4] : memref<1x128xf32, #tpu.memory_space<vmem>>, vector<1x128xf32>
    %4 = vector.broadcast %3 : vector<1x128xf32> to vector<16x128xf32>
    %5 = arith.addf %2, %4 : vector<16x128xf32>
    %cst_5 = arith.constant 0.000000e+00 : f32
    %6 = vector.broadcast %cst_5 : f32 to vector<16x128xf32>
    %7 = arith.maximumf %5, %6 : vector<16x128xf32>
    %8 = arith.truncf %7 : vector<16x128xf32> to vector<16x128xbf16>
    %c0_6 = arith.constant 0 : index
    %c0_7 = arith.constant 0 : index
    %9 = vector.load %arg4[%c0_6, %c0_7] : memref<128x128xbf16, #tpu.memory_space<vmem>>, vector<128x128xbf16>
    %cst_8 = arith.constant dense<0.000000e+00> : vector<16x128xf32>
    %10 = tpu.matmul %8, %9, %cst_8 {dimension_numbers = #tpu.dot_dimension_numbers<[1], [0], [0], [1], [0, 0, 1, 1], [], []>} : vector<16x128xbf16>, vector<128x128xbf16>, vector<16x128xf32> -> vector<16x128xf32>
    %c0_9 = arith.constant 0 : index
    %c0_10 = arith.constant 0 : index
    %11 = vector.load %arg5[%c0_9, %c0_10] : memref<1x128xf32, #tpu.memory_space<vmem>>, vector<1x128xf32>
    %12 = vector.broadcast %11 : vector<1x128xf32> to vector<16x128xf32>
    %13 = arith.addf %10, %12 : vector<16x128xf32>
    %cst_11 = arith.constant 0.000000e+00 : f32
    %14 = vector.broadcast %cst_11 : f32 to vector<16x128xf32>
    %15 = arith.maximumf %13, %14 : vector<16x128xf32>
    %16 = arith.truncf %15 : vector<16x128xf32> to vector<16x128xbf16>
    %c0_12 = arith.constant 0 : index
    %c0_13 = arith.constant 0 : index
    %17 = vector.load %arg6[%c0_12, %c0_13] : memref<128x256xbf16, #tpu.memory_space<vmem>>, vector<128x256xbf16>
    %cst_14 = arith.constant dense<0.000000e+00> : vector<16x256xf32>
    %18 = tpu.matmul %16, %17, %cst_14 {dimension_numbers = #tpu.dot_dimension_numbers<[1], [0], [0], [1], [0, 0, 1, 1], [], []>} : vector<16x128xbf16>, vector<128x256xbf16>, vector<16x256xf32> -> vector<16x256xf32>
    %c0_15 = arith.constant 0 : index
    %c0_16 = arith.constant 0 : index
    %19 = vector.load %arg7[%c0_15, %c0_16] : memref<1x256xf32, #tpu.memory_space<vmem>>, vector<1x256xf32>
    %20 = vector.broadcast %19 : vector<1x256xf32> to vector<16x256xf32>
    %21 = arith.addf %18, %20 : vector<16x256xf32>
    %cst_17 = arith.constant -1.500000e+01 : f32
    %cst_18 = arith.constant 1.500000e+01 : f32
    %22 = vector.broadcast %cst_17 : f32 to vector<16x256xf32>
    %23 = arith.maximumf %22, %21 : vector<16x256xf32>
    %24 = vector.broadcast %cst_18 : f32 to vector<16x256xf32>
    %25 = arith.minimumf %24, %23 : vector<16x256xf32>
    %26 = math.exp %25 : vector<16x256xf32>
    %27 = tpu.iota {dimensions = array<i32: 1>} : vector<16x256xi32>
    %c128_i32 = arith.constant 128 : i32
    %28 = vector.broadcast %c128_i32 : i32 to vector<16x256xi32>
    %29 = arith.cmpi slt, %27, %28 : vector<16x256xi32>
    %30 = arith.select %29, %21, %26 : vector<16x256xi1>, vector<16x256xf32>
    %c0_19 = arith.constant 0 : index
    %c0_20 = arith.constant 0 : index
    %31 = vector.load %arg8[%c0_19, %c0_20] : memref<16x256xf32, #tpu.memory_space<vmem>>, vector<16x256xf32>
    tpu.vector_store %arg8[%c0_19, %c0_20], %30 {strides = array<i32>} : memref<16x256xf32, #tpu.memory_space<vmem>>, vector<16x256xf32>,
    return
  }
  func.func @transform_0(%arg0: i32) -> (i32, i32) {
    %c0_i32 = arith.constant 0 : i32
    %c0_i32_0 = arith.constant 0 : i32
    return %arg0, %c0_i32 : i32, i32
  }
  func.func @transform_1(%arg0: i32) -> (i32, i32) {
    %c0_i32 = arith.constant 0 : i32
    %c0_i32_0 = arith.constant 0 : i32
    %c0_i32_1 = arith.constant 0 : i32
    return %c0_i32, %c0_i32_0 : i32, i32
  }
  func.func @transform_2(%arg0: i32) -> (i32, i32) {
    %c0_i32 = arith.constant 0 : i32
    %c0_i32_0 = arith.constant 0 : i32
    %c0_i32_1 = arith.constant 0 : i32
    return %c0_i32, %c0_i32_0 : i32, i32
  }
  func.func @transform_3(%arg0: i32) -> (i32, i32) {
    %c0_i32 = arith.constant 0 : i32
    %c0_i32_0 = arith.constant 0 : i32
    %c0_i32_1 = arith.constant 0 : i32
    return %c0_i32, %c0_i32_0 : i32, i32
  }
  func.func @transform_4(%arg0: i32) -> (i32, i32) {
    %c0_i32 = arith.constant 0 : i32
    %c0_i32_0 = arith.constant 0 : i32
    %c0_i32_1 = arith.constant 0 : i32
    return %c0_i32, %c0_i32_0 : i32, i32
  }
  func.func @transform_5(%arg0: i32) -> (i32, i32) {
    %c0_i32 = arith.constant 0 : i32
    %c0_i32_0 = arith.constant 0 : i32
    %c0_i32_1 = arith.constant 0 : i32
    return %c0_i32, %c0_i32_0 : i32, i32
  }
  func.func @transform_6(%arg0: i32) -> (i32, i32) {
    %c0_i32 = arith.constant 0 : i32
    %c0_i32_0 = arith.constant 0 : i32
    %c0_i32_1 = arith.constant 0 : i32
    return %c0_i32, %c0_i32_0 : i32, i32
  }
  func.func @transform_7(%arg0: i32) -> (i32, i32) {
    %c0_i32 = arith.constant 0 : i32
    %c0_i32_0 = arith.constant 0 : i32
    return %arg0, %c0_i32 : i32, i32
  }
}

</mosaic_0001>

<llo_original>
// kernel: tpu_custom_call.1
$region0: #{tpu_custom_call.1}
  #allocation0 [shape = 'u32[]', space=smem, size = 0x4, offset = 0x4, fixed_abs, tag = 'smem constant byte address 0x4 - core index']
  #allocation1 [shape = 'u32[144,128]{1,0:T(1,128)}', space=vmem, size = 0x12000, scoped, tag = 'internal scratch']
  %s0 = inlined_call_operand.hbm [shape: bf16[16,128], index: 0, kind: input, shape index: {}]
  %s1 = inlined_call_operand.hbm [shape: bf16[128,128], index: 1, kind: input, shape index: {}]
  %s2 = inlined_call_operand.vmem [shape: f32[1,128], index: 2, kind: input, shape index: {}]
  %s3 = inlined_call_operand.hbm [shape: bf16[128,128], index: 3, kind: input, shape index: {}]
  %s4 = inlined_call_operand.vmem [shape: f32[1,128], index: 4, kind: input, shape index: {}]
  %s5 = inlined_call_operand.hbm [shape: bf16[128,256], index: 5, kind: input, shape index: {}]
  %s6 = inlined_call_operand.vmem [shape: f32[1,256], index: 6, kind: input, shape index: {}]
  %s7 = inlined_call_operand.hbm [shape: f32[16,256], index: 7, kind: output, shape index: {}]
  %s8 = sld [smem:[#allocation0]]
  $region54: #{tpu_custom_call.1} parent=0
    _
  %s10 = ssub.s32 1, %s8
  %s11 = scalar_select 0, %s10, %s8
  $region1: #{tpu_custom_call.1} parent=0
    #allocation2 [shape = 'u8[4096]{0}', space=vmem, size = 0x1000, scoped, tag = 'input window, operand 0, single buffered']
    #allocation3 [shape = 's32[1]{0}', space=sflag, size = 0x4, scoped, tag = 'scoped memory for tpu_custom_call.1']
    #allocation4 [shape = 's32[1]{0}', space=sflag, size = 0x4, scoped, tag = 'scoped memory for tpu_custom_call.1']
    #allocation5 [shape = 'u8[32768]{0}', space=vmem, size = 0x8000, scoped, tag = 'input window, operand 1, single buffered']
    #allocation6 [shape = 's32[1]{0}', space=sflag, size = 0x4, scoped, tag = 'scoped memory for tpu_custom_call.1']
    #allocation7 [shape = 'u8[32768]{0}', space=vmem, size = 0x8000, scoped, tag = 'input window, operand 3, single buffered']
    #allocation8 [shape = 'u8[65536]{0}', space=vmem, size = 0x10000, scoped, tag = 'input window, operand 5, single buffered']
    #allocation9 [shape = 's32[1]{0}', space=sflag, size = 0x4, scoped, tag = 'scoped memory for tpu_custom_call.1']
    #allocation10 [shape = 'u8[16384]{0}', space=vmem, size = 0x4000, scoped, tag = 'output window, operand 0, single buffered']
    %12 = vsyncpa [#allocation3], 0
    %13 = vsyncpa [#allocation6], 0
    %14 = vsyncpa [#allocation9], 0
    %15 = vsyncpa [#allocation4], 0
    // Predicated region
    $region2: #{tpu_custom_call.1} parent=1 // pred_check
      _
    $region3: #{tpu_custom_call.1} parent=1 // pred_check_branch
      %17 = sbr.rel (0) target = $region5
    $region4: #{tpu_custom_call.1} parent=1 // pred_region
      %s19 = ssub.s32 128, 128
      %20 = vsyncadd [#allocation3], %s19
      %s21 = sshll.u32 [#allocation2], 4
      %s22 = int_to_ptr.vmem [resolvable:$true] %s21
      %27 = dma.hbm_to_vmem [thread:$0]  %s0, 128, %s22, [#allocation3], 64, 64, 4
    $region5: #{tpu_custom_call.1} parent=1 // pred_fallthru
      _
    // Predicated region
    $region6: #{tpu_custom_call.1} parent=1 // pred_check
      _
    $region7: #{tpu_custom_call.1} parent=1 // pred_check_branch
      %29 = sbr.rel (0) target = $region9
    $region8: #{tpu_custom_call.1} parent=1 // pred_region
      %s31 = ssub.s32 1024, 1024
      %32 = vsyncadd [#allocation6], %s31
      %s33 = sshll.u32 [#allocation5], 4
      %s34 = int_to_ptr.vmem [resolvable:$true] %s33
      %39 = dma.hbm_to_vmem [thread:$0]  %s1, 1024, %s34, [#allocation6], 64, 64, 4
    $region9: #{tpu_custom_call.1} parent=1 // pred_fallthru
      _
    // Predicated region
    $region10: #{tpu_custom_call.1} parent=1 // pred_check
      _
    $region11: #{tpu_custom_call.1} parent=1 // pred_check_branch
      %41 = sbr.rel (0) target = $region13
    $region12: #{tpu_custom_call.1} parent=1 // pred_region
      _
    $region13: #{tpu_custom_call.1} parent=1 // pred_fallthru
      _
    // Predicated region
    $region14: #{tpu_custom_call.1} parent=1 // pred_check
      _
    $region15: #{tpu_custom_call.1} parent=1 // pred_check_branch
      %43 = sbr.rel (0) target = $region17
    $region16: #{tpu_custom_call.1} parent=1 // pred_region
      %s45 = ssub.s32 1024, 1024
      %46 = vsyncadd [#allocation6], %s45
      %s47 = sshll.u32 [#allocation7], 4
      %s48 = int_to_ptr.vmem [resolvable:$true] %s47
      %53 = dma.hbm_to_vmem [thread:$0]  %s3, 1024, %s48, [#allocation6], 64, 64, 4
    $region17: #{tpu_custom_call.1} parent=1 // pred_fallthru
      _
    // Predicated region
    $region18: #{tpu_custom_call.1} parent=1 // pred_check
      _
    $region19: #{tpu_custom_call.1} parent=1 // pred_check_branch
      %55 = sbr.rel (0) target = $region21
    $region20: #{tpu_custom_call.1} parent=1 // pred_region
      _
    $region21: #{tpu_custom_call.1} parent=1 // pred_fallthru
      _
    // Predicated region
    $region22: #{tpu_custom_call.1} parent=1 // pred_check
      _
    $region23: #{tpu_custom_call.1} parent=1 // pred_check_branch
      %57 = sbr.rel (0) target = $region25
    $region24: #{tpu_custom_call.1} parent=1 // pred_region
      %s59 = ssub.s32 2048, 2048
      %60 = vsyncadd [#allocation9], %s59
      %s61 = sshll.u32 [#allocation8], 4
      %s62 = int_to_ptr.vmem [resolvable:$true] %s61
      %67 = dma.hbm_to_vmem [thread:$0]  %s5, 2048, %s62, [#allocation9], 128, 128, 8
    $region25: #{tpu_custom_call.1} parent=1 // pred_fallthru
      _
    // Predicated region
    $region26: #{tpu_custom_call.1} parent=1 // pred_check
      _
    $region27: #{tpu_custom_call.1} parent=1 // pred_check_branch
      %69 = sbr.rel (0) target = $region29
    $region28: #{tpu_custom_call.1} parent=1 // pred_region
      _
    $region29: #{tpu_custom_call.1} parent=1 // pred_fallthru
      _
    // Predicated region
    $region30: #{tpu_custom_call.1} parent=1 // pred_check
      _
    $region31: #{tpu_custom_call.1} parent=1 // pred_check_branch
      %71 = sbr.rel (0) target = $region33
    $region32: #{tpu_custom_call.1} parent=1 // pred_region
      %72 = dma.done [#allocation3], 128
    $region33: #{tpu_custom_call.1} parent=1 // pred_fallthru
      _
    // Predicated region
    $region34: #{tpu_custom_call.1} parent=1 // pred_check
      _
    $region35: #{tpu_custom_call.1} parent=1 // pred_check_branch
      %74 = sbr.rel (0) target = $region37
    $region36: #{tpu_custom_call.1} parent=1 // pred_region
      %75 = dma.done [#allocation6], 1024
    $region37: #{tpu_custom_call.1} parent=1 // pred_fallthru
      _
    // Predicated region
    $region38: #{tpu_custom_call.1} parent=1 // pred_check
      _
    $region39: #{tpu_custom_call.1} parent=1 // pred_check_branch
      %77 = sbr.rel (0) target = $region41
    $region40: #{tpu_custom_call.1} parent=1 // pred_region
      %78 = dma.done [#allocation6], 1024
    $region41: #{tpu_custom_call.1} parent=1 // pred_fallthru
      _
    // Predicated region
    $region42: #{tpu_custom_call.1} parent=1 // pred_check
      _
    $region43: #{tpu_custom_call.1} parent=1 // pred_check_branch
      %80 = sbr.rel (0) target = $region45
    $region44: #{tpu_custom_call.1} parent=1 // pred_region
      %81 = dma.done [#allocation9], 2048
    $region45: #{tpu_custom_call.1} parent=1 // pred_fallthru
      _
    %v83 = vld [vmem:[#allocation2] sm:$0xf]
    %v84 = vld [vmem:[#allocation2 + $0x4] sm:$0xf]
    %v85 = vld [vmem:[#allocation5] sm:$0xf]
    %v86 = vld [vmem:[#allocation5 + $0x4] sm:$0xf]
    %v87 = vld [vmem:[#allocation5 + $0x8] sm:$0xf]
    %v88 = vld [vmem:[#allocation5 + $0xc] sm:$0xf]
    %v89 = vld [vmem:[#allocation5 + $0x10] sm:$0xf]
    %v90 = vld [vmem:[#allocation5 + $0x14] sm:$0xf]
    %v91 = vld [vmem:[#allocation5 + $0x18] sm:$0xf]
    %v92 = vld [vmem:[#allocation5 + $0x1c] sm:$0xf]
    %v93 = vld [vmem:[#allocation5 + $0x20] sm:$0xf]
    %v94 = vld [vmem:[#allocation5 + $0x24] sm:$0xf]
    %v95 = vld [vmem:[#allocation5 + $0x28] sm:$0xf]
    %v96 = vld [vmem:[#allocation5 + $0x2c] sm:$0xf]
    %v97 = vld [vmem:[#allocation5 + $0x30] sm:$0xf]
    %v98 = vld [vmem:[#allocation5 + $0x34] sm:$0xf]
    %v99 = vld [vmem:[#allocation5 + $0x38] sm:$0xf]
    %v100 = vld [vmem:[#allocation5 + $0x3c] sm:$0xf]
    %v101 = vld [vmem:[%s2] sm:$0x1]
    %v103 = vlaneseq
    %v104 = vshrl.u32 %v103, 7
    %v105 = vsub.s32 0, %v104
    %v106 = vrot.slane %v101, %v105
    %v110 = vunpack.c.l.b16 %v83
    %v111 = vunpack.c.l.b16 %v84
    %v112 = vpack.c.b16 %v111, %v110
    %v130 = vunpack.c.l.b16 %v85
    %v131 = vunpack.c.l.b16 %v86
    %v132 = vunpack.c.l.b16 %v87
    %v133 = vunpack.c.l.b16 %v88
    %v134 = vunpack.c.l.b16 %v89
    %v135 = vunpack.c.l.b16 %v90
    %v136 = vunpack.c.l.b16 %v91
    %v137 = vunpack.c.l.b16 %v92
    %v138 = vunpack.c.l.b16 %v93
    %v139 = vunpack.c.l.b16 %v94
    %v140 = vunpack.c.l.b16 %v95
    %v141 = vunpack.c.l.b16 %v96
    %v142 = vunpack.c.l.b16 %v97
    %v143 = vunpack.c.l.b16 %v98
    %v144 = vunpack.c.l.b16 %v99
    %v145 = vunpack.c.l.b16 %v100
    %v146 = vpack.c.b16 %v131, %v130
    %v147 = vpack.c.b16 %v133, %v132
    %v148 = vpack.c.b16 %v135, %v134
    %v149 = vpack.c.b16 %v137, %v136
    %v150 = vpack.c.b16 %v139, %v138
    %v151 = vpack.c.b16 %v141, %v140
    %v152 = vpack.c.b16 %v143, %v142
    %v153 = vpack.c.b16 %v145, %v144
    %162 = vmatprep.subr.bf16.mxu0 0
    %163 = vmatpush1.bf16.msra.mxu0 %v146
    %164 = vmatprep.subr.bf16.mxu0 0
    %165 = vmatpush1.bf16.msra.mxu0 %v147
    %166 = vmatprep.subr.bf16.mxu0 0
    %167 = vmatpush1.bf16.msra.mxu0 %v148
    %168 = vmatprep.subr.bf16.mxu0 0
    %169 = vmatpush1.bf16.msra.mxu0 %v149
    %170 = vmatprep.subr.bf16.mxu0 0
    %171 = vmatpush1.bf16.msra.mxu0 %v150
    %172 = vmatprep.subr.bf16.mxu0 0
    %173 = vmatpush1.bf16.msra.mxu0 %v151
    %174 = vmatprep.subr.bf16.mxu0 0
    %175 = vmatpush1.bf16.msra.mxu0 %v152
    %176 = vmatprep.subr.bf16.mxu0 0
    %177 = vmatpush1.bf16.msra.mxu0 %v153
    %178 = vmatprep.subr.bf16.mxu0 0
    %179 = vmatpush1.bf16.msra.mxu0 0
    %180 = vmatprep.subr.bf16.mxu0 0
    %181 = vmatpush1.bf16.msra.mxu0 0
    %182 = vmatprep.subr.bf16.mxu0 0
    %183 = vmatpush1.bf16.msra.mxu0 0
    %184 = vmatprep.subr.bf16.mxu0 0
    %185 = vmatpush1.bf16.msra.mxu0 0
    %186 = vmatprep.subr.bf16.mxu0 0
    %187 = vmatpush1.bf16.msra.mxu0 0
    %188 = vmatprep.subr.bf16.mxu0 0
    %189 = vmatpush1.bf16.msra.mxu0 0
    %190 = vmatprep.subr.bf16.mxu0 0
    %191 = vmatpush1.bf16.msra.mxu0 0
    %192 = vmatprep.subr.bf16.mxu0 0
    %193 = vmatpush1.bf16.msra.mxu0 0
    %194 = vmatprep.mubr.bf16.mxu0 0
    %195 = vmatmul.mubr.bf16.gmra.mrb[0].mxu0 %v112
    %v196 = vpop.f32.mrb[0].mxu0
    %v197 = vadd.f32 %v106, %v196
    %v198 = vpop.f32.mrb[0].mxu0
    %v199 = vpop.f32.mrb[0].mxu0
    %v200 = vadd.f32 %v106, %v199
    %v201 = vpop.f32.mrb[0].mxu0
    %202 = vdwg.mxu0
    %v203 = vmax.f32 %v197, 0.0
    %v204 = vmax.f32 %v200, 0.0
    %v205 = vpack.c.bf16 %v204, %v203
    %v206 = vld [vmem:[#allocation7] sm:$0xf]
    %v207 = vld [vmem:[#allocation7 + $0x4] sm:$0xf]
    %v208 = vld [vmem:[#allocation7 + $0x8] sm:$0xf]
    %v209 = vld [vmem:[#allocation7 + $0xc] sm:$0xf]
    %v210 = vld [vmem:[#allocation7 + $0x10] sm:$0xf]
    %v211 = vld [vmem:[#allocation7 + $0x14] sm:$0xf]
    %v212 = vld [vmem:[#allocation7 + $0x18] sm:$0xf]
    %v213 = vld [vmem:[#allocation7 + $0x1c] sm:$0xf]
    %v214 = vld [vmem:[#allocation7 + $0x20] sm:$0xf]
    %v215 = vld [vmem:[#allocation7 + $0x24] sm:$0xf]
    %v216 = vld [vmem:[#allocation7 + $0x28] sm:$0xf]
    %v217 = vld [vmem:[#allocation7 + $0x2c] sm:$0xf]
    %v218 = vld [vmem:[#allocation7 + $0x30] sm:$0xf]
    %v219 = vld [vmem:[#allocation7 + $0x34] sm:$0xf]
    %v220 = vld [vmem:[#allocation7 + $0x38] sm:$0xf]
    %v221 = vld [vmem:[#allocation7 + $0x3c] sm:$0xf]
    %v222 = vld [vmem:[%s4] sm:$0x1]
    %v224 = vlaneseq
    %v225 = vshrl.u32 %v224, 7
    %v226 = vsub.s32 0, %v225
    %v227 = vrot.slane %v222, %v226
    %v245 = vunpack.c.l.b16 %v206
    %v246 = vunpack.c.l.b16 %v207
    %v247 = vunpack.c.l.b16 %v208
    %v248 = vunpack.c.l.b16 %v209
    %v249 = vunpack.c.l.b16 %v210
    %v250 = vunpack.c.l.b16 %v211
    %v251 = vunpack.c.l.b16 %v212
    %v252 = vunpack.c.l.b16 %v213
    %v253 = vunpack.c.l.b16 %v214
    %v254 = vunpack.c.l.b16 %v215
    %v255 = vunpack.c.l.b16 %v216
    %v256 = vunpack.c.l.b16 %v217
    %v257 = vunpack.c.l.b16 %v218
    %v258 = vunpack.c.l.b16 %v219
    %v259 = vunpack.c.l.b16 %v220
    %v260 = vunpack.c.l.b16 %v221
    %v261 = vpack.c.b16 %v246, %v245
    %v262 = vpack.c.b16 %v248, %v247
    %v263 = vpack.c.b16 %v250, %v249
    %v264 = vpack.c.b16 %v252, %v251
    %v265 = vpack.c.b16 %v254, %v253
    %v266 = vpack.c.b16 %v256, %v255
    %v267 = vpack.c.b16 %v258, %v257
    %v268 = vpack.c.b16 %v260, %v259
    %277 = vmatprep.subr.bf16.mxu0 0
    %278 = vmatpush1.bf16.msra.mxu0 %v261
    %279 = vmatprep.subr.bf16.mxu0 0
    %280 = vmatpush1.bf16.msra.mxu0 %v262
    %281 = vmatprep.subr.bf16.mxu0 0
    %282 = vmatpush1.bf16.msra.mxu0 %v263
    %283 = vmatprep.subr.bf16.mxu0 0
    %284 = vmatpush1.bf16.msra.mxu0 %v264
    %285 = vmatprep.subr.bf16.mxu0 0
    %286 = vmatpush1.bf16.msra.mxu0 %v265
    %287 = vmatprep.subr.bf16.mxu0 0
    %288 = vmatpush1.bf16.msra.mxu0 %v266
    %289 = vmatprep.subr.bf16.mxu0 0
    %290 = vmatpush1.bf16.msra.mxu0 %v267
    %291 = vmatprep.subr.bf16.mxu0 0
    %292 = vmatpush1.bf16.msra.mxu0 %v268
    %293 = vmatprep.subr.bf16.mxu0 0
    %294 = vmatpush1.bf16.msra.mxu0 0
    %295 = vmatprep.subr.bf16.mxu0 0
    %296 = vmatpush1.bf16.msra.mxu0 0
    %297 = vmatprep.subr.bf16.mxu0 0
    %298 = vmatpush1.bf16.msra.mxu0 0
    %299 = vmatprep.subr.bf16.mxu0 0
    %300 = vmatpush1.bf16.msra.mxu0 0
    %301 = vmatprep.subr.bf16.mxu0 0
    %302 = vmatpush1.bf16.msra.mxu0 0
    %303 = vmatprep.subr.bf16.mxu0 0
    %304 = vmatpush1.bf16.msra.mxu0 0
    %305 = vmatprep.subr.bf16.mxu0 0
    %306 = vmatpush1.bf16.msra.mxu0 0
    %307 = vmatprep.subr.bf16.mxu0 0
    %308 = vmatpush1.bf16.msra.mxu0 0
    %309 = vmatprep.mubr.bf16.mxu0 0
    %310 = vmatmul.mubr.bf16.gmra.mrb[0].mxu0 %v205
    %v311 = vpop.f32.mrb[0].mxu0
    %v312 = vadd.f32 %v227, %v311
    %v313 = vpop.f32.mrb[0].mxu0
    %v314 = vpop.f32.mrb[0].mxu0
    %v315 = vadd.f32 %v227, %v314
    %v316 = vpop.f32.mrb[0].mxu0
    %317 = vdwg.mxu0
    %v318 = vmax.f32 %v312, 0.0
    %v319 = vmax.f32 %v315, 0.0
    %v320 = vpack.c.bf16 %v319, %v318
    %v321 = vld [vmem:[#allocation8] sm:$0xff]
    %v322 = vld [vmem:[#allocation8 + $0x8] sm:$0xff]
    %v323 = vld [vmem:[#allocation8 + $0x10] sm:$0xff]
    %v324 = vld [vmem:[#allocation8 + $0x18] sm:$0xff]
    %v325 = vld [vmem:[#allocation8 + $0x20] sm:$0xff]
    %v326 = vld [vmem:[#allocation8 + $0x28] sm:$0xff]
    %v327 = vld [vmem:[#allocation8 + $0x30] sm:$0xff]
    %v328 = vld [vmem:[#allocation8 + $0x38] sm:$0xff]
    %v329 = vld [vmem:[#allocation8 + $0x40] sm:$0xff]
    %v330 = vld [vmem:[#allocation8 + $0x48] sm:$0xff]
    %v331 = vld [vmem:[#allocation8 + $0x50] sm:$0xff]
    %v332 = vld [vmem:[#allocation8 + $0x58] sm:$0xff]
    %v333 = vld [vmem:[#allocation8 + $0x60] sm:$0xff]
    %v334 = vld [vmem:[#allocation8 + $0x68] sm:$0xff]
    %v335 = vld [vmem:[#allocation8 + $0x70] sm:$0xff]
    %v336 = vld [vmem:[#allocation8 + $0x78] sm:$0xff]
    %v337 = vld [vmem:[%s6] sm:$0x3]
    %v339 = vlaneseq
    %v340 = vshrl.u32 %v339, 7
    %v341 = vsub.s32 0, %v340
    %v342 = vrot.slane %v337, %v341
    %v343 = vlaneseq
    %v344 = vshrl.u32 %v343, 7
    %v345 = vsub.s32 1, %v344
    %v346 = vrot.slane %v337, %v345
    %v365 = vunpack.c.l.b16 %v321
    %v366 = vunpack.c.h.b16 %v321
    %v367 = vunpack.c.l.b16 %v322
    %v368 = vunpack.c.h.b16 %v322
    %v369 = vunpack.c.l.b16 %v323
    %v370 = vunpack.c.h.b16 %v323
    %v371 = vunpack.c.l.b16 %v324
    %v372 = vunpack.c.h.b16 %v324
    %v373 = vunpack.c.l.b16 %v325
    %v374 = vunpack.c.h.b16 %v325
    %v375 = vunpack.c.l.b16 %v326
    %v376 = vunpack.c.h.b16 %v326
    %v377 = vunpack.c.l.b16 %v327
    %v378 = vunpack.c.h.b16 %v327
    %v379 = vunpack.c.l.b16 %v328
    %v380 = vunpack.c.h.b16 %v328
    %v381 = vunpack.c.l.b16 %v329
    %v382 = vunpack.c.h.b16 %v329
    %v383 = vunpack.c.l.b16 %v330
    %v384 = vunpack.c.h.b16 %v330
    %v385 = vunpack.c.l.b16 %v331
    %v386 = vunpack.c.h.b16 %v331
    %v387 = vunpack.c.l.b16 %v332
    %v388 = vunpack.c.h.b16 %v332
    %v389 = vunpack.c.l.b16 %v333
    %v390 = vunpack.c.h.b16 %v333
    %v391 = vunpack.c.l.b16 %v334
    %v392 = vunpack.c.h.b16 %v334
    %v393 = vunpack.c.l.b16 %v335
    %v394 = vunpack.c.h.b16 %v335
    %v395 = vunpack.c.l.b16 %v336
    %v396 = vunpack.c.h.b16 %v336
    %v397 = vpack.c.b16 %v367, %v365
    %v398 = vpack.c.b16 %v368, %v366
    %v399 = vpack.c.b16 %v371, %v369
    %v400 = vpack.c.b16 %v372, %v370
    %v401 = vpack.c.b16 %v375, %v373
    %v402 = vpack.c.b16 %v376, %v374
    %v403 = vpack.c.b16 %v379, %v377
    %v404 = vpack.c.b16 %v380, %v378
    %v405 = vpack.c.b16 %v383, %v381
    %v406 = vpack.c.b16 %v384, %v382
    %v407 = vpack.c.b16 %v387, %v385
    %v408 = vpack.c.b16 %v388, %v386
    %v409 = vpack.c.b16 %v391, %v389
    %v410 = vpack.c.b16 %v392, %v390
    %v411 = vpack.c.b16 %v395, %v393
    %v412 = vpack.c.b16 %v396, %v394
    %429 = vmatprep.subr.bf16.mxu0 %v398
    %430 = vmatpush1.bf16.msra.mxu0 %v397
    %431 = vmatprep.subr.bf16.mxu0 %v400
    %432 = vmatpush1.bf16.msra.mxu0 %v399
    %433 = vmatprep.subr.bf16.mxu0 %v402
    %434 = vmatpush1.bf16.msra.mxu0 %v401
    %435 = vmatprep.subr.bf16.mxu0 %v404
    %436 = vmatpush1.bf16.msra.mxu0 %v403
    %437 = vmatprep.subr.bf16.mxu0 %v406
    %438 = vmatpush1.bf16.msra.mxu0 %v405
    %439 = vmatprep.subr.bf16.mxu0 %v408
    %440 = vmatpush1.bf16.msra.mxu0 %v407
    %441 = vmatprep.subr.bf16.mxu0 %v410
    %442 = vmatpush1.bf16.msra.mxu0 %v409
    %443 = vmatprep.subr.bf16.mxu0 %v412
    %444 = vmatpush1.bf16.msra.mxu0 %v411
    %445 = vmatprep.subr.bf16.mxu0 0
    %446 = vmatpush1.bf16.msra.mxu0 0
    %447 = vmatprep.subr.bf16.mxu0 0
    %448 = vmatpush1.bf16.msra.mxu0 0
    %449 = vmatprep.subr.bf16.mxu0 0
    %450 = vmatpush1.bf16.msra.mxu0 0
    %451 = vmatprep.subr.bf16.mxu0 0
    %452 = vmatpush1.bf16.msra.mxu0 0
    %453 = vmatprep.subr.bf16.mxu0 0
    %454 = vmatpush1.bf16.msra.mxu0 0
    %455 = vmatprep.subr.bf16.mxu0 0
    %456 = vmatpush1.bf16.msra.mxu0 0
    %457 = vmatprep.subr.bf16.mxu0 0
    %458 = vmatpush1.bf16.msra.mxu0 0
    %459 = vmatprep.subr.bf16.mxu0 0
    %460 = vmatpush1.bf16.msra.mxu0 0
    %461 = vmatprep.mubr.bf16.mxu0 0
    %462 = vmatmul.mubr.bf16.gmra.mrb[0].mxu0 %v320
    %v463 = vpop.f32.mrb[0].mxu0
    %v464 = vadd.f32 %v342, %v463
    %v465 = vpop.f32.mrb[0].mxu0
    %v466 = vadd.f32 %v346, %v465
    %v467 = vpop.f32.mrb[0].mxu0
    %v468 = vadd.f32 %v342, %v467
    %v469 = vpop.f32.mrb[0].mxu0
    %v470 = vadd.f32 %v346, %v469
    %471 = vdwg.mxu0
    %v472 = vmax.f32 %v464, -15.0
    %v473 = vmax.f32 %v466, -15.0
    %v474 = vmax.f32 %v468, -15.0
    %v475 = vmax.f32 %v470, -15.0
    %v476 = vmin.f32 %v472, 15.0
    %v477 = vmin.f32 %v473, 15.0
    %v478 = vmin.f32 %v474, 15.0
    %v479 = vmin.f32 %v475, 15.0
    %v480 = vmul.f32 %v476, 1.442695
    %v481 = vpow.pop %v480
    %v482 = vmul.f32 %v477, 1.442695
    %v483 = vpow.pop %v482
    %v484 = vmul.f32 %v478, 1.442695
    %v485 = vpow.pop %v484
    %v486 = vmul.f32 %v479, 1.442695
    %v487 = vpow.pop %v486
    %v488 = vlaneseq
    %v489 = vand.u32 %v488, 127
    %v490 = vadd.s32 %v489, 128
    %vm491 = vcmp.lt.s32.totalorder %v489, 128
    %vm492 = vcmp.lt.s32.totalorder %v490, 128
    %v493 = vsel %vm491, %v464, %v481
    %v494 = vsel %vm492, %v466, %v483
    %v495 = vsel %vm491, %v468, %v485
    %v496 = vsel %vm492, %v470, %v487
    %497 = vst [vmem:[#allocation10] sm:$0xff] %v493
    %498 = vst [vmem:[#allocation10 + $0x8] sm:$0xff] %v494
    %499 = vst [vmem:[#allocation10 + $0x10] sm:$0xff] %v495
    %500 = vst [vmem:[#allocation10 + $0x18] sm:$0xff] %v496
    // Predicated region
    $region46: #{tpu_custom_call.1} parent=1 // pred_check
      _
    $region47: #{tpu_custom_call.1} parent=1 // pred_check_branch
      %502 = sbr.rel (0) target = $region49
    $region48: #{tpu_custom_call.1} parent=1 // pred_region
      %s504 = ssub.s32 512, 512
      %505 = vsyncadd [#allocation4], %s504
      %s506 = sshll.u32 [#allocation10], 4
      %s507 = int_to_ptr.vmem [resolvable:$true] %s506
      %512 = dma.vmem_to_hbm [thread:$0]  %s507, 512, %s7, [#allocation4], 256, 256, 16
    $region49: #{tpu_custom_call.1} parent=1 // pred_fallthru
      _
    // Predicated region
    $region50: #{tpu_custom_call.1} parent=1 // pred_check
      _
    $region51: #{tpu_custom_call.1} parent=1 // pred_check_branch
      %514 = sbr.rel (0) target = $region53
    $region52: #{tpu_custom_call.1} parent=1 // pred_region
      %515 = dma.done [#allocation4], 512
    $region53: #{tpu_custom_call.1} parent=1 // pred_fallthru
      _
    %516 = vsyncpa [#allocation3], 1
    %517 = vsyncpa [#allocation6], 1
    %518 = vsyncpa [#allocation9], 1
    %519 = vsyncpa [#allocation4], 1

</llo_original>
